<compile_context>
chip_gen: v7x
topology: tpu7x:2x2x1
jax: 0.10.0
libtpu: 0.0.40
codegen_flags: <defaults>
</compile_context>

<pallas_src>
import jax
import jax.numpy as jnp
from jax.experimental import pallas as pl
from jax.experimental.pallas import tpu as pltpu


def _round_up(x: int, m: int) -> int:
    return (x + m - 1) // m * m


def _energy_kernel(q_ref, d_ref, w1q_ref, w1d_ref, b1_ref, w2_ref, b2_ref, o_ref):
    """One batch tile: h = relu(q@W1q^T + d@W1d^T + b1); e = h.w2 + b2."""
    cdt = w1q_ref.dtype
    q = q_ref[...]
    d = d_ref[...]
    # Cast only if the caller did not already supply MXU-native (bf16) inputs.
    if q.dtype != cdt:
        q = q.astype(cdt)
    if d.dtype != cdt:
        d = d.astype(cdt)

    # First layer: two MXU matmuls with f32 accumulation. No (TB, 2H) concat
    # temp, no cross-lane shuffles.
    h = jnp.dot(q, w1q_ref[...], preferred_element_type=jnp.float32)
    h = h + jnp.dot(d, w1d_ref[...], preferred_element_type=jnp.float32)
    h = jnp.maximum(h + b1_ref[...], 0.0)                      # (TB, H) f32

    # Second layer: an N=1 matmul wastes the MXU -> VPU multiply by the (1, H)
    # w2 row + lane reduction, in f32 (v5e-friendly).
    e = jnp.sum(h * w2_ref[...], axis=-1)                      # (TB,) f32
    # Lane-dense (1, TB) writeback (unmasked vst) instead of a (TB, 1) column.
    o_ref[...] = (e[None, :] + b2_ref[...]).astype(o_ref.dtype)


def prepare_params(w1, b1, w2, b2, param_dtype=jnp.bfloat16):
    """One-time weight prep, hoisted out of the per-call path.

    w1: (H, 2H) torch [out, in] layout, b1: (H,), w2: (1, H), b2: (1,).
    Returns (w1q_t, w1d_t, b1_row, w2_row, b2_s) for energy_scorer_prepared.

    For bit-closer parity with the f32 PyTorch reference pass
    param_dtype=jnp.float32 (costs VMEM, not time — the kernel is HBM-bound
    on activations for typical H).
    """
    H = w1.shape[0]
    w1 = jnp.asarray(w1)
    w1q_t = jnp.asarray(w1[:, :H].T, dtype=param_dtype)        # (H, H)  q half of W1^T
    w1d_t = jnp.asarray(w1[:, H:].T, dtype=param_dtype)        # (H, H)  d half of W1^T
    b1_row = jnp.asarray(b1, jnp.float32).reshape(1, H)        # (1, H)  f32
    w2_row = jnp.asarray(w2, jnp.float32).reshape(1, H)        # (1, H)  f32 (VPU path)
    b2_s = jnp.asarray(b2, jnp.float32).reshape(1, 1)          # (1, 1)  f32
    return w1q_t, w1d_t, b1_row, w2_row, b2_s


def _pick_tile(B: int):
    """Batch tile / grid selection.

    Small B -> one exact block. Large B -> >=2 grid steps (both v7x cores),
    tile a multiple of 128 (lane-dense output tiling), capped at 512 rows
    (measured mem-bound tilings reach ~85% of HBM roofline at 512).
    """
    if B <= 128:
        return B, 1
    tb = min(512, _round_up(pl.cdiv(B, 2), 128))
    return tb, pl.cdiv(B, tb)


@jax.jit
def energy_scorer_prepared(q_emb, d_emb, w1q_t, w1d_t, b1_row, w2_row, b2_s):
    """q_emb, d_emb: (B, H). Params from prepare_params(). Returns (B,) energies.

    For best DMA efficiency produce q_emb/d_emb in bf16 upstream (halves the
    dominant input HBM traffic); f32 inputs are accepted and cast in-kernel.
    """
    B, H = q_emb.shape
    assert d_emb.shape == (B, H), d_emb.shape
    assert w1q_t.shape == (H, H) and w1d_t.shape == (H, H)

    TB, nblk = _pick_tile(B)
    out_dtype = q_emb.dtype
    in_bytes = q_emb.dtype.itemsize
    w_bytes = w1q_t.dtype.itemsize

    # Double-buffered VMEM budget (weights have a constant index_map and are
    # only fetched once, but still get 2 buffers by default).
    # TODO: for very large H on v5e/v7x, single-buffer the resident weights
    # (pipeline_mode=pl.Buffered(1)) and/or add a K-axis grid dimension with a
    # f32 accumulator scratch instead of shrinking TB.
    vmem_needed = (
        2 * 2 * H * H * w_bytes            # W1q^T + W1d^T, 2 buffers each
        + 2 * 2 * TB * H * in_bytes        # q, d tiles, double-buffered
        + 2 * TB * out_dtype.itemsize      # output row tile
        + 2 * 3 * H * 4                    # b1 / w2 / b2 rows (f32)
    )
    vmem_limit = int(min(max(2 * vmem_needed, 32 * 1024 * 1024),
                         64 * 1024 * 1024))

    cost = pl.CostEstimate(
        flops=4 * B * H * H + 4 * B * H,
        transcendentals=0,
        bytes_accessed=(2 * B * H * in_bytes + 2 * H * H * w_bytes
                        + 3 * H * 4 + B * out_dtype.itemsize),
    )

    out = pl.pallas_call(
        _energy_kernel,
        out_shape=jax.ShapeDtypeStruct((1, nblk * TB), out_dtype),
        grid=(nblk,),
        in_specs=[
            pl.BlockSpec((TB, H), lambda i: (i, 0)),      # q tile (pipelined; partial tail OK)
            pl.BlockSpec((TB, H), lambda i: (i, 0)),      # d tile (pipelined; partial tail OK)
            pl.BlockSpec((H, H), lambda i: (0, 0)),       # W1q^T, VMEM-resident
            pl.BlockSpec((H, H), lambda i: (0, 0)),       # W1d^T, VMEM-resident
            pl.BlockSpec((1, H), lambda i: (0, 0)),       # b1 row, resident
            pl.BlockSpec((1, H), lambda i: (0, 0)),       # w2 row, resident
            pl.BlockSpec((1, 1), lambda i: (0, 0)),       # b2, resident
        ],
        out_specs=pl.BlockSpec((1, TB), lambda i: (0, i)),  # lane-dense energies
        compiler_params=pltpu.CompilerParams(
            dimension_semantics=("parallel",),              # megacore on v7x
            vmem_limit_bytes=vmem_limit,
        ),
        cost_estimate=cost,
    )(q_emb, d_emb, w1q_t, w1d_t, b1_row, w2_row, b2_s)

    # (1, nblk*TB) -> (B,); drops the unspecified tail rows of a ragged batch.
    return out.reshape(-1)[:B]


def energy_scorer(q_emb, d_emb, w1, b1, w2, b2, param_dtype=jnp.bfloat16):
    """Convenience wrapper (does weight prep per call). For repeated calls,
    call prepare_params() once and use energy_scorer_prepared()."""
    return energy_scorer_prepared(
        q_emb, d_emb, *prepare_params(w1, b1, w2, b2, param_dtype))


def init_params(key, hidden_dim, dtype=jnp.float32):
    """Deterministic init mirroring nn.Linear default (uniform +/- 1/sqrt(fan_in))."""
    k1, k2, k3, k4 = jax.random.split(key, 4)
    fan_in1 = 2 * hidden_dim
    bound1 = 1.0 / jnp.sqrt(fan_in1)
    w1 = jax.random.uniform(k1, (hidden_dim, 2 * hidden_dim), dtype, -bound1, bound1)
    b1 = jax.random.uniform(k2, (hidden_dim,), dtype, -bound1, bound1)
    fan_in2 = hidden_dim
    bound2 = 1.0 / jnp.sqrt(fan_in2)
    w2 = jax.random.uniform(k3, (1, hidden_dim), dtype, -bound2, bound2)
    b2 = jax.random.uniform(k4, (1,), dtype, -bound2, bound2)
    return w1, b1, w2, b2


def energy_scorer_ref(q_emb, d_emb, w1, b1, w2, b2):
    joint = jnp.concatenate([q_emb, d_emb], axis=-1)
    h = jnp.maximum(joint @ w1.T + b1, 0.0)
    return (h @ w2.T + b2)[:, 0]


if __name__ == "__main__":
    key = jax.random.PRNGKey(0)
    kq, kd, kp, kq2, kd2 = jax.random.split(key, 5)

    B, H = 8, 32
    q_emb = jax.random.normal(kq, (B, H), jnp.float32)
    d_emb = jax.random.normal(kd, (B, H), jnp.float32)
    w1, b1, w2, b2 = init_params(kp, H)

    # One-time weight prep; steady-state calls are a single pallas_call.
    params = prepare_params(w1, b1, w2, b2)

    out = jax.block_until_ready(energy_scorer_prepared(q_emb, d_emb, *params))
    ref = energy_scorer_ref(q_emb, d_emb, w1, b1, w2, b2)
    assert out.shape == (B,), out.shape
    # bf16 weight storage (f32 accumulation) -> looser tolerance vs f32 ref.
    assert jnp.allclose(out, ref, atol=2e-2, rtol=2e-2), (out, ref)

    # Ragged larger batch exercises the multi-block grid + partial tail block
    # (no jnp.pad copy) + lane-dense output path.
    B2 = 300
    q2 = jax.random.normal(kq2, (B2, H), jnp.float32)
    d2 = jax.random.normal(kd2, (B2, H), jnp.float32)
    out2 = jax.block_until_ready(energy_scorer_prepared(q2, d2, *params))
    ref2 = energy_scorer_ref(q2, d2, w1, b1, w2, b2)
    assert out2.shape == (B2,), out2.shape
    assert jnp.allclose(out2, ref2, atol=2e-2, rtol=2e-2)

    print("KERNEL_OK")
</pallas_src>

<mosaic_0001>
module attributes {stable_mosaic.version = 11 : i64} {
  func.func @_energy_kernel(%arg0: i32, %arg1: memref<8x32xf32, #tpu.memory_space<vmem>>, %arg2: memref<8x32xf32, #tpu.memory_space<vmem>>, %arg3: memref<32x32xbf16, #tpu.memory_space<vmem>>, %arg4: memref<32x32xbf16, #tpu.memory_space<vmem>>, %arg5: memref<1x32xf32, #tpu.memory_space<vmem>>, %arg6: memref<1x32xf32, #tpu.memory_space<vmem>>, %arg7: memref<1x1xf32, #tpu.memory_space<vmem>>, %arg8: memref<1x8xf32, #tpu.memory_space<vmem>>) attributes {dimension_semantics = [#tpu.dimension_semantics<parallel>], iteration_bounds = array<i64: 1>, scalar_prefetch = 0 : i64, scratch_operands = 0 : i64, tpu.core_type = #tpu.core_type<tc>, window_params = [{transform_indices = @transform_0, window_bounds = array<i64: 8, 32>}, {transform_indices = @transform_1, window_bounds = array<i64: 8, 32>}, {pipeline_mode = #tpu.pipeline_mode<synchronous>, transform_indices = @transform_2, window_bounds = array<i64: 32, 32>}, {pipeline_mode = #tpu.pipeline_mode<synchronous>, transform_indices = @transform_3, window_bounds = array<i64: 32, 32>}, {pipeline_mode = #tpu.pipeline_mode<synchronous>, transform_indices = @transform_4, window_bounds = array<i64: 1, 32>}, {pipeline_mode = #tpu.pipeline_mode<synchronous>, transform_indices = @transform_5, window_bounds = array<i64: 1, 32>}, {pipeline_mode = #tpu.pipeline_mode<synchronous>, transform_indices = @transform_6, window_bounds = array<i64: 1, 1>}, {transform_indices = @transform_7, window_bounds = array<i64: 1, 8>}]} {
    %c0 = arith.constant 0 : index
    %c0_0 = arith.constant 0 : index
    %0 = vector.load %arg1[%c0, %c0_0] : memref<8x32xf32, #tpu.memory_space<vmem>>, vector<8x32xf32>
    %c0_1 = arith.constant 0 : index
    %c0_2 = arith.constant 0 : index
    %1 = vector.load %arg2[%c0_1, %c0_2] : memref<8x32xf32, #tpu.memory_space<vmem>>, vector<8x32xf32>
    %2 = arith.truncf %0 : vector<8x32xf32> to vector<8x32xbf16>
    %3 = arith.truncf %1 : vector<8x32xf32> to vector<8x32xbf16>
    %c0_3 = arith.constant 0 : index
    %c0_4 = arith.constant 0 : index
    %4 = vector.load %arg3[%c0_3, %c0_4] : memref<32x32xbf16, #tpu.memory_space<vmem>>, vector<32x32xbf16>
    %cst = arith.constant dense<0.000000e+00> : vector<8x32xf32>
    %5 = tpu.matmul %2, %4, %cst {dimension_numbers = #tpu.dot_dimension_numbers<[1], [0], [0], [1], [0, 0, 1, 1], [], []>} : vector<8x32xbf16>, vector<32x32xbf16>, vector<8x32xf32> -> vector<8x32xf32>
    %c0_5 = arith.constant 0 : index
    %c0_6 = arith.constant 0 : index
    %6 = vector.load %arg4[%c0_5, %c0_6] : memref<32x32xbf16, #tpu.memory_space<vmem>>, vector<32x32xbf16>
    %cst_7 = arith.constant dense<0.000000e+00> : vector<8x32xf32>
    %7 = tpu.matmul %3, %6, %cst_7 {dimension_numbers = #tpu.dot_dimension_numbers<[1], [0], [0], [1], [0, 0, 1, 1], [], []>} : vector<8x32xbf16>, vector<32x32xbf16>, vector<8x32xf32> -> vector<8x32xf32>
    %8 = arith.addf %5, %7 : vector<8x32xf32>
    %c0_8 = arith.constant 0 : index
    %c0_9 = arith.constant 0 : index
    %9 = vector.load %arg5[%c0_8, %c0_9] : memref<1x32xf32, #tpu.memory_space<vmem>>, vector<1x32xf32>
    %10 = vector.broadcast %9 : vector<1x32xf32> to vector<8x32xf32>
    %11 = arith.addf %8, %10 : vector<8x32xf32>
    %cst_10 = arith.constant 0.000000e+00 : f32
    %12 = vector.broadcast %cst_10 : f32 to vector<8x32xf32>
    %13 = arith.maximumf %11, %12 : vector<8x32xf32>
    %c0_11 = arith.constant 0 : index
    %c0_12 = arith.constant 0 : index
    %14 = vector.load %arg6[%c0_11, %c0_12] : memref<1x32xf32, #tpu.memory_space<vmem>>, vector<1x32xf32>
    %15 = vector.broadcast %14 : vector<1x32xf32> to vector<8x32xf32>
    %16 = arith.mulf %13, %15 : vector<8x32xf32>
    %cst_13 = arith.constant dense<0.000000e+00> : vector<8xf32>
    %17 = vector.multi_reduction <add>, %16, %cst_13 [1] : vector<8x32xf32> to vector<8xf32>
    %18 = vector.shape_cast %17 : vector<8xf32> to vector<1x8xf32>
    %c0_14 = arith.constant 0 : index
    %c0_15 = arith.constant 0 : index
    %19 = vector.load %arg7[%c0_14, %c0_15] : memref<1x1xf32, #tpu.memory_space<vmem>>, vector<1x1xf32>
    %20 = vector.broadcast %19 : vector<1x1xf32> to vector<1x8xf32>
    %21 = arith.addf %18, %20 : vector<1x8xf32>
    %c0_16 = arith.constant 0 : index
    %c0_17 = arith.constant 0 : index
    %22 = vector.load %arg8[%c0_16, %c0_17] : memref<1x8xf32, #tpu.memory_space<vmem>>, vector<1x8xf32>
    tpu.vector_store %arg8[%c0_16, %c0_17], %21 {strides = array<i32>} : memref<1x8xf32, #tpu.memory_space<vmem>>, vector<1x8xf32>,
    return
  }
  func.func @transform_0(%arg0: i32) -> (i32, i32) {
    %c0_i32 = arith.constant 0 : i32
    %c0_i32_0 = arith.constant 0 : i32
    return %arg0, %c0_i32 : i32, i32
  }
  func.func @transform_1(%arg0: i32) -> (i32, i32) {
    %c0_i32 = arith.constant 0 : i32
    %c0_i32_0 = arith.constant 0 : i32
    return %arg0, %c0_i32 : i32, i32
  }
  func.func @transform_2(%arg0: i32) -> (i32, i32) {
    %c0_i32 = arith.constant 0 : i32
    %c0_i32_0 = arith.constant 0 : i32
    %c0_i32_1 = arith.constant 0 : i32
    return %c0_i32, %c0_i32_0 : i32, i32
  }
  func.func @transform_3(%arg0: i32) -> (i32, i32) {
    %c0_i32 = arith.constant 0 : i32
    %c0_i32_0 = arith.constant 0 : i32
    %c0_i32_1 = arith.constant 0 : i32
    return %c0_i32, %c0_i32_0 : i32, i32
  }
  func.func @transform_4(%arg0: i32) -> (i32, i32) {
    %c0_i32 = arith.constant 0 : i32
    %c0_i32_0 = arith.constant 0 : i32
    %c0_i32_1 = arith.constant 0 : i32
    return %c0_i32, %c0_i32_0 : i32, i32
  }
  func.func @transform_5(%arg0: i32) -> (i32, i32) {
    %c0_i32 = arith.constant 0 : i32
    %c0_i32_0 = arith.constant 0 : i32
    %c0_i32_1 = arith.constant 0 : i32
    return %c0_i32, %c0_i32_0 : i32, i32
  }
  func.func @transform_6(%arg0: i32) -> (i32, i32) {
    %c0_i32 = arith.constant 0 : i32
    %c0_i32_0 = arith.constant 0 : i32
    %c0_i32_1 = arith.constant 0 : i32
    return %c0_i32, %c0_i32_0 : i32, i32
  }
  func.func @transform_7(%arg0: i32) -> (i32, i32) {
    %c0_i32 = arith.constant 0 : i32
    %c0_i32_0 = arith.constant 0 : i32
    return %c0_i32, %arg0 : i32, i32
  }
}

</mosaic_0001>

<llo_original>
// kernel: energy_scorer_prepared.1
$region0: #{energy_scorer_prepared.1}
  #allocation0 [shape = 'u32[]', space=smem, size = 0x4, offset = 0x4, fixed_abs, tag = 'smem constant byte address 0x4 - core index']
  #allocation1 [shape = 'u32[144,128]{1,0:T(1,128)}', space=vmem, size = 0x12000, scoped, tag = 'internal scratch']
  #allocation2 [shape = 'f32[1,1]{1,0:T(1,128)S(1)}', space=vmem, size = 0x200, scoped, tag = 'scoped memory for energy_scorer_prepared.1']
  %s0 = inlined_call_operand.hbm [shape: f32[8,32], index: 0, kind: input, shape index: {}]
  %s1 = inlined_call_operand.hbm [shape: f32[8,32], index: 1, kind: input, shape index: {}]
  %s2 = inlined_call_operand.hbm [shape: bf16[32,32], index: 2, kind: input, shape index: {}]
  %s3 = inlined_call_operand.hbm [shape: bf16[32,32], index: 3, kind: input, shape index: {}]
  %s4 = inlined_call_operand.vmem [shape: f32[1,32], index: 4, kind: input, shape index: {}]
  %s5 = inlined_call_operand.vmem [shape: f32[1,32], index: 5, kind: input, shape index: {}]
  %s6 = inlined_call_operand.<no memory space> [shape: f32[1,1], index: 6, kind: input, shape index: {}]
  %s7 = inlined_call_operand.hbm [shape: f32[1,8], index: 7, kind: output, shape index: {}]
  %s8 = sld [smem:[#allocation0]]
  $region54: #{energy_scorer_prepared.1} parent=0
    _
  %s10 = ssub.s32 1, %s8
  %s11 = scalar_select 0, %s10, %s8
  %v12 = vstv %s6
  %13 = vst [vmem:[#allocation2] sm:$0x1] %v12
  $region1: #{energy_scorer_prepared.1} parent=0
    #allocation3 [shape = 'u8[4096]{0}', space=vmem, size = 0x1000, scoped, tag = 'input window, operand 0, single buffered']
    #allocation4 [shape = 's32[1]{0}', space=sflag, size = 0x4, scoped, tag = 'scoped memory for energy_scorer_prepared.1']
    #allocation5 [shape = 's32[1]{0}', space=sflag, size = 0x4, scoped, tag = 'scoped memory for energy_scorer_prepared.1']
    #allocation6 [shape = 'u8[4096]{0}', space=vmem, size = 0x1000, scoped, tag = 'input window, operand 1, single buffered']
    #allocation7 [shape = 's32[1]{0}', space=sflag, size = 0x4, scoped, tag = 'scoped memory for energy_scorer_prepared.1']
    #allocation8 [shape = 'u8[8192]{0}', space=vmem, size = 0x2000, scoped, tag = 'input window, operand 2, single buffered']
    #allocation9 [shape = 'u8[8192]{0}', space=vmem, size = 0x2000, scoped, tag = 'input window, operand 3, single buffered']
    #allocation10 [shape = 's32[1]{0}', space=sflag, size = 0x4, scoped, tag = 'scoped memory for energy_scorer_prepared.1']
    #allocation11 [shape = 'u8[512]{0}', space=vmem, size = 0x400, scoped, tag = 'output window, operand 0, single buffered']
    %14 = vsyncpa [#allocation4], 0
    %15 = vsyncpa [#allocation7], 0
    %16 = vsyncpa [#allocation10], 0
    %17 = vsyncpa [#allocation5], 0
    // Predicated region
    $region2: #{energy_scorer_prepared.1} parent=1 // pred_check
      _
    $region3: #{energy_scorer_prepared.1} parent=1 // pred_check_branch
      %19 = sbr.rel (0) target = $region5
    $region4: #{energy_scorer_prepared.1} parent=1 // pred_region
      %s21 = ssub.s32 128, 128
      %22 = vsyncadd [#allocation4], %s21
      %s24 = sshll.u32 [#allocation3], 4
      %s25 = int_to_ptr.vmem [resolvable:$true] %s24
      %27 = dma.hbm_to_vmem [thread:$0]  %s0, 128, %s25, [#allocation4]
    $region5: #{energy_scorer_prepared.1} parent=1 // pred_fallthru
      _
    // Predicated region
    $region6: #{energy_scorer_prepared.1} parent=1 // pred_check
      _
    $region7: #{energy_scorer_prepared.1} parent=1 // pred_check_branch
      %29 = sbr.rel (0) target = $region9
    $region8: #{energy_scorer_prepared.1} parent=1 // pred_region
      %s31 = ssub.s32 128, 128
      %32 = vsyncadd [#allocation7], %s31
      %s34 = sshll.u32 [#allocation6], 4
      %s35 = int_to_ptr.vmem [resolvable:$true] %s34
      %37 = dma.hbm_to_vmem [thread:$0]  %s1, 128, %s35, [#allocation7]
    $region9: #{energy_scorer_prepared.1} parent=1 // pred_fallthru
      _
    // Predicated region
    $region10: #{energy_scorer_prepared.1} parent=1 // pred_check
      _
    $region11: #{energy_scorer_prepared.1} parent=1 // pred_check_branch
      %39 = sbr.rel (0) target = $region13
    $region12: #{energy_scorer_prepared.1} parent=1 // pred_region
      %s41 = ssub.s32 256, 256
      %42 = vsyncadd [#allocation7], %s41
      %s43 = sshll.u32 [#allocation8], 4
      %s44 = int_to_ptr.vmem [resolvable:$true] %s43
      %49 = dma.hbm_to_vmem [thread:$0]  %s2, 256, %s44, [#allocation7], 64, 64, 4
    $region13: #{energy_scorer_prepared.1} parent=1 // pred_fallthru
      _
    // Predicated region
    $region14: #{energy_scorer_prepared.1} parent=1 // pred_check
      _
    $region15: #{energy_scorer_prepared.1} parent=1 // pred_check_branch
      %51 = sbr.rel (0) target = $region17
    $region16: #{energy_scorer_prepared.1} parent=1 // pred_region
      %s53 = ssub.s32 256, 256
      %54 = vsyncadd [#allocation10], %s53
      %s55 = sshll.u32 [#allocation9], 4
      %s56 = int_to_ptr.vmem [resolvable:$true] %s55
      %61 = dma.hbm_to_vmem [thread:$0]  %s3, 256, %s56, [#allocation10], 64, 64, 4
    $region17: #{energy_scorer_prepared.1} parent=1 // pred_fallthru
      _
    // Predicated region
    $region18: #{energy_scorer_prepared.1} parent=1 // pred_check
      _
    $region19: #{energy_scorer_prepared.1} parent=1 // pred_check_branch
      %63 = sbr.rel (0) target = $region21
    $region20: #{energy_scorer_prepared.1} parent=1 // pred_region
      _
    $region21: #{energy_scorer_prepared.1} parent=1 // pred_fallthru
      _
    // Predicated region
    $region22: #{energy_scorer_prepared.1} parent=1 // pred_check
      _
    $region23: #{energy_scorer_prepared.1} parent=1 // pred_check_branch
      %65 = sbr.rel (0) target = $region25
    $region24: #{energy_scorer_prepared.1} parent=1 // pred_region
      _
    $region25: #{energy_scorer_prepared.1} parent=1 // pred_fallthru
      _
    // Predicated region
    $region26: #{energy_scorer_prepared.1} parent=1 // pred_check
      _
    $region27: #{energy_scorer_prepared.1} parent=1 // pred_check_branch
      %67 = sbr.rel (0) target = $region29
    $region28: #{energy_scorer_prepared.1} parent=1 // pred_region
      _
    $region29: #{energy_scorer_prepared.1} parent=1 // pred_fallthru
      _
    // Predicated region
    $region30: #{energy_scorer_prepared.1} parent=1 // pred_check
      _
    $region31: #{energy_scorer_prepared.1} parent=1 // pred_check_branch
      %69 = sbr.rel (0) target = $region33
    $region32: #{energy_scorer_prepared.1} parent=1 // pred_region
      %70 = dma.done [#allocation4], 128
    $region33: #{energy_scorer_prepared.1} parent=1 // pred_fallthru
      _
    // Predicated region
    $region34: #{energy_scorer_prepared.1} parent=1 // pred_check
      _
    $region35: #{energy_scorer_prepared.1} parent=1 // pred_check_branch
      %72 = sbr.rel (0) target = $region37
    $region36: #{energy_scorer_prepared.1} parent=1 // pred_region
      %73 = dma.done [#allocation7], 128
    $region37: #{energy_scorer_prepared.1} parent=1 // pred_fallthru
      _
    // Predicated region
    $region38: #{energy_scorer_prepared.1} parent=1 // pred_check
      _
    $region39: #{energy_scorer_prepared.1} parent=1 // pred_check_branch
      %75 = sbr.rel (0) target = $region41
    $region40: #{energy_scorer_prepared.1} parent=1 // pred_region
      %76 = dma.done [#allocation7], 256
    $region41: #{energy_scorer_prepared.1} parent=1 // pred_fallthru
      _
    // Predicated region
    $region42: #{energy_scorer_prepared.1} parent=1 // pred_check
      _
    $region43: #{energy_scorer_prepared.1} parent=1 // pred_check_branch
      %78 = sbr.rel (0) target = $region45
    $region44: #{energy_scorer_prepared.1} parent=1 // pred_region
      %79 = dma.done [#allocation10], 256
    $region45: #{energy_scorer_prepared.1} parent=1 // pred_fallthru
      _
    %v81 = vld [vmem:[#allocation3] sm:$0xff]
    %v82 = vld [vmem:[#allocation6] sm:$0xff]
    %v83 = vpack.c.bf16 %v81, %v81
    %v84 = vpack.c.bf16 %v82, %v82
    %v85 = vld [vmem:[#allocation8] sm:$0xf]
    %v86 = vld [vmem:[#allocation8 + $0x4] sm:$0xf]
    %v87 = vld [vmem:[#allocation8 + $0x8] sm:$0xf]
    %v88 = vld [vmem:[#allocation8 + $0xc] sm:$0xf]
    %v89 = vld [vmem:[#allocation9] sm:$0xf]
    %v90 = vld [vmem:[#allocation9 + $0x4] sm:$0xf]
    %v91 = vld [vmem:[#allocation9 + $0x8] sm:$0xf]
    %v92 = vld [vmem:[#allocation9 + $0xc] sm:$0xf]
    %v97 = vunpack.c.l.b16 %v89
    %v98 = vunpack.c.l.b16 %v90
    %v99 = vunpack.c.l.b16 %v91
    %v100 = vunpack.c.l.b16 %v92
    %v101 = vpack.c.b16 %v98, %v97
    %v102 = vpack.c.b16 %v100, %v99
    %vm105 = vcmask 261120
    %v107 = vsel %vm105, %v84, 0
    %109 = vmatprep.subr.bf16.mxu0 0
    %110 = vmatpush1.bf16.msra.mxu0 %v101
    %111 = vmatprep.subr.bf16.mxu0 0
    %112 = vmatpush1.bf16.msra.mxu0 %v102
    %113 = vmatprep.subr.bf16.mxu0 0
    %114 = vmatpush1.bf16.msra.mxu0 0
    %115 = vmatprep.subr.bf16.mxu0 0
    %116 = vmatpush1.bf16.msra.mxu0 0
    %117 = vmatprep.subr.bf16.mxu0 0
    %118 = vmatpush1.bf16.msra.mxu0 0
    %119 = vmatprep.subr.bf16.mxu0 0
    %120 = vmatpush1.bf16.msra.mxu0 0
    %121 = vmatprep.subr.bf16.mxu0 0
    %122 = vmatpush1.bf16.msra.mxu0 0
    %123 = vmatprep.subr.bf16.mxu0 0
    %124 = vmatpush1.bf16.msra.mxu0 0
    %125 = vmatprep.subr.bf16.mxu0 0
    %126 = vmatpush1.bf16.msra.mxu0 0
    %127 = vmatprep.subr.bf16.mxu0 0
    %128 = vmatpush1.bf16.msra.mxu0 0
    %129 = vmatprep.subr.bf16.mxu0 0
    %130 = vmatpush1.bf16.msra.mxu0 0
    %131 = vmatprep.subr.bf16.mxu0 0
    %132 = vmatpush1.bf16.msra.mxu0 0
    %133 = vmatprep.subr.bf16.mxu0 0
    %134 = vmatpush1.bf16.msra.mxu0 0
    %135 = vmatprep.subr.bf16.mxu0 0
    %136 = vmatpush1.bf16.msra.mxu0 0
    %137 = vmatprep.subr.bf16.mxu0 0
    %138 = vmatpush1.bf16.msra.mxu0 0
    %139 = vmatprep.subr.bf16.mxu0 0
    %140 = vmatpush1.bf16.msra.mxu0 0
    %141 = vmatprep.mubr.bf16.mxu0 0
    %142 = vmatmul.mubr.bf16.gmra.mrb[0].mxu0 %v107
    %v143 = vpop.f32.mrb[0].mxu0
    %v144 = vadd.f32 0.0, %v143
    %v145 = vpop.f32.mrb[0].mxu0
    %v146 = vpop.f32.mrb[0].mxu0
    %v147 = vpop.f32.mrb[0].mxu0
    %148 = vdwg.mxu0
    %v153 = vunpack.c.l.b16 %v85
    %v154 = vunpack.c.l.b16 %v86
    %v155 = vunpack.c.l.b16 %v87
    %v156 = vunpack.c.l.b16 %v88
    %v157 = vpack.c.b16 %v154, %v153
    %v158 = vpack.c.b16 %v156, %v155
    %v162 = vsel %vm105, %v83, 0
    %164 = vmatprep.subr.bf16.mxu0 0
    %165 = vmatpush1.bf16.msra.mxu0 %v157
    %166 = vmatprep.subr.bf16.mxu0 0
    %167 = vmatpush1.bf16.msra.mxu0 %v158
    %168 = vmatprep.subr.bf16.mxu0 0
    %169 = vmatpush1.bf16.msra.mxu0 0
    %170 = vmatprep.subr.bf16.mxu0 0
    %171 = vmatpush1.bf16.msra.mxu0 0
    %172 = vmatprep.subr.bf16.mxu0 0
    %173 = vmatpush1.bf16.msra.mxu0 0
    %174 = vmatprep.subr.bf16.mxu0 0
    %175 = vmatpush1.bf16.msra.mxu0 0
    %176 = vmatprep.subr.bf16.mxu0 0
    %177 = vmatpush1.bf16.msra.mxu0 0
    %178 = vmatprep.subr.bf16.mxu0 0
    %179 = vmatpush1.bf16.msra.mxu0 0
    %180 = vmatprep.subr.bf16.mxu0 0
    %181 = vmatpush1.bf16.msra.mxu0 0
    %182 = vmatprep.subr.bf16.mxu0 0
    %183 = vmatpush1.bf16.msra.mxu0 0
    %184 = vmatprep.subr.bf16.mxu0 0
    %185 = vmatpush1.bf16.msra.mxu0 0
    %186 = vmatprep.subr.bf16.mxu0 0
    %187 = vmatpush1.bf16.msra.mxu0 0
    %188 = vmatprep.subr.bf16.mxu0 0
    %189 = vmatpush1.bf16.msra.mxu0 0
    %190 = vmatprep.subr.bf16.mxu0 0
    %191 = vmatpush1.bf16.msra.mxu0 0
    %192 = vmatprep.subr.bf16.mxu0 0
    %193 = vmatpush1.bf16.msra.mxu0 0
    %194 = vmatprep.subr.bf16.mxu0 0
    %195 = vmatpush1.bf16.msra.mxu0 0
    %196 = vmatprep.mubr.bf16.mxu0 0
    %197 = vmatmul.mubr.bf16.gmra.mrb[0].mxu0 %v162
    %v198 = vpop.f32.mrb[0].mxu0
    %v199 = vadd.f32 %v144, %v198
    %v200 = vpop.f32.mrb[0].mxu0
    %v201 = vpop.f32.mrb[0].mxu0
    %v202 = vpop.f32.mrb[0].mxu0
    %203 = vdwg.mxu0
    %v204 = vld [vmem:[%s4] sm:$0x1]
    %v206 = vlaneseq
    %v207 = vshrl.u32 %v206, 7
    %v208 = vsub.s32 0, %v207
    %v209 = vrot.slane %v204, %v208
    %v211 = vadd.f32 %v199, %v209
    %v212 = vmax.f32 %v211, 0.0
    %v213 = vld [vmem:[%s5] sm:$0x1]
    %v215 = vlaneseq
    %v216 = vshrl.u32 %v215, 7
    %v217 = vsub.s32 0, %v216
    %v218 = vrot.slane %v213, %v217
    %v220 = vmul.f32 %v212, %v218
    %v221 = vsel %vm105, %v220, 0.0
    %222 = vadd.xlane.f32.xlu0 %v221
    %v223 = vpop.xlane.xlu0 %222
    %v224 = vld [vmem:[#allocation2] sm:$0x1]
    %226 = vset.pattern.permute.xlu0 0
    %227 = vperm.xlu0 %226, %v224
    %v228 = vpop.permute.xlu0 %227
    %v230 = vlaneseq
    %v231 = vshrl.u32 %v230, 7
    %v232 = vsub.s32 0, %v231
    %v233 = vrot.slane %v228, %v232
    %v234 = vadd.f32 %v223, %v233
    %v236 = vlaneseq
    %v237 = vand.u32 %v236, 127
    %v238 = vlaneseq
    %v239 = vshrl.u32 %v238, 7
    %v240 = vsub.s32 %v237, %v239
    %v241 = vrot.slane %v234, %v240
    %vm243 = vcmask 57344
    %244 = vst.msk [vmem:[#allocation11] sm:$0x1] %vm243, %v241
    // Predicated region
    $region46: #{energy_scorer_prepared.1} parent=1 // pred_check
      _
    $region47: #{energy_scorer_prepared.1} parent=1 // pred_check_branch
      %246 = sbr.rel (0) target = $region49
    $region48: #{energy_scorer_prepared.1} parent=1 // pred_region
      %s248 = ssub.s32 16, 16
      %249 = vsyncadd [#allocation5], %s248
      %s251 = sshll.u32 [#allocation11], 4
      %s252 = int_to_ptr.vmem [resolvable:$true] %s251
      %254 = dma.vmem_to_hbm [thread:$0]  %s252, 16, %s7, [#allocation5]
    $region49: #{energy_scorer_prepared.1} parent=1 // pred_fallthru
      _
    // Predicated region
    $region50: #{energy_scorer_prepared.1} parent=1 // pred_check
      _
    $region51: #{energy_scorer_prepared.1} parent=1 // pred_check_branch
      %256 = sbr.rel (0) target = $region53
    $region52: #{energy_scorer_prepared.1} parent=1 // pred_region
      %257 = dma.done [#allocation5], 16
    $region53: #{energy_scorer_prepared.1} parent=1 // pred_fallthru
      _
    %258 = vsyncpa [#allocation4], 1
    %259 = vsyncpa [#allocation7], 1
    %260 = vsyncpa [#allocation10], 1
    %261 = vsyncpa [#allocation5], 1

</llo_original>
